<compile_context>
chip_gen: v6e
topology: v6e:2x2x1
jax: 0.10.0
libtpu: 0.0.40
codegen_flags: <defaults>
</compile_context>

<pallas_src>
import functools

import jax
import jax.numpy as jnp
from jax.experimental import pallas as pl
from jax.experimental.pallas import tpu as pltpu

_LANE = 128


def _round_up(x: int, m: int) -> int:
    return (x + m - 1) // m * m


def _loss_kernel(logits_ref, probs_ref, sbox_ref, lab_ref, attr_ref, gbox_ref,
                 out_ref, acc_ref, *,
                 eos_coef: float, num_boxes: float, total_b: int, block_rows: int):
    i = pl.program_id(0)
    n_steps = pl.num_programs(0)

    @pl.when(i == 0)
    def _():
        acc_ref[...] = jnp.zeros_like(acc_ref)

    logits = logits_ref[...].astype(jnp.float32)   # [TM, C1]
    probs = probs_ref[...].astype(jnp.float32)     # [TM, A]
    sbox = sbox_ref[...].astype(jnp.float32)       # [TM, 4]
    labels = lab_ref[...]                          # [TM, 1] int32
    attr = attr_ref[...].astype(jnp.float32)       # [TM, A]
    gbox = gbox_ref[...].astype(jnp.float32)       # [TM, 4]

    tm, c1 = logits.shape

    # Valid-row mask for the (possibly padded) last block.
    row = jax.lax.broadcasted_iota(jnp.int32, (tm, 1), 0) + i * block_rows
    mask = row < total_b                            # [TM, 1] bool
    zero = jnp.zeros((tm, 1), jnp.float32)

    # ------------------------------------------------------------------
    # loss_labels: weighted cross-entropy (weight = 1, last class = eos_coef)
    # ------------------------------------------------------------------
    row_max = jnp.max(logits, axis=1, keepdims=True)
    shifted = logits - row_max
    lse = jnp.log(jnp.sum(jnp.exp(shifted), axis=1, keepdims=True))
    log_probs = shifted - lse                                            # [TM, C1]

    col = jax.lax.broadcasted_iota(jnp.int32, (tm, c1), 1)
    onehot = (col == labels).astype(jnp.float32)
    picked = jnp.sum(log_probs * onehot, axis=1, keepdims=True)          # [TM, 1]
    w_per = jnp.where(labels == c1 - 1, eos_coef, 1.0).astype(jnp.float32)
    ce_num = jnp.sum(jnp.where(mask, -picked * w_per, zero), axis=0, keepdims=True)
    ce_den = jnp.sum(jnp.where(mask, w_per, zero), axis=0, keepdims=True)

    # class_error: top-1 accuracy (first index on ties)
    is_max = logits == row_max
    argmax = jnp.min(jnp.where(is_max, col, c1), axis=1, keepdims=True)  # [TM, 1]
    correct = (argmax == labels).astype(jnp.float32)
    n_correct = jnp.sum(jnp.where(mask, correct, zero), axis=0, keepdims=True)

    # ------------------------------------------------------------------
    # attr_loss_labels: balanced BCE on multi-label probabilities.
    # ------------------------------------------------------------------
    safe_p = jnp.where(mask, probs, 0.5)            # padded rows -> benign values
    logp = jnp.log(safe_p)
    log1mp = jnp.log(1.0 - safe_p)
    wt_pos = jnp.sum(attr, axis=1, keepdims=True) + 0.001
    wt_neg = jnp.sum(1.0 - attr, axis=1, keepdims=True)
    pos_term = jnp.sum(logp * attr, axis=1, keepdims=True) / wt_pos
    neg_term = jnp.sum(log1mp * (1.0 - attr), axis=1, keepdims=True) / wt_neg
    bce_sum = jnp.sum(jnp.where(mask, pos_term + neg_term, zero), axis=0, keepdims=True)
    # running sum of log(p) for the PyTorch "0 * log().sum()" NaN/Inf fallback
    logp_total = jnp.sum(jnp.where(mask, jnp.sum(logp, axis=1, keepdims=True), zero),
                         axis=0, keepdims=True)

    # ------------------------------------------------------------------
    # loss_boxes: L1 + GIoU (diagonal), boxes in (cx, cy, w, h).
    # ------------------------------------------------------------------
    l1_row = jnp.sum(jnp.abs(sbox - gbox), axis=1, keepdims=True)
    bbox_sum = jnp.sum(jnp.where(mask, l1_row, zero), axis=0, keepdims=True)

    def to_xyxy(b):
        cx, cy, w, h = b[:, 0:1], b[:, 1:2], b[:, 2:3], b[:, 3:4]
        return cx - 0.5 * w, cy - 0.5 * h, cx + 0.5 * w, cy + 0.5 * h

    sx0, sy0, sx1, sy1 = to_xyxy(sbox)
    gx0, gy0, gx1, gy1 = to_xyxy(gbox)
    area_s = (sx1 - sx0) * (sy1 - sy0)
    area_g = (gx1 - gx0) * (gy1 - gy0)
    iw = jnp.maximum(jnp.minimum(sx1, gx1) - jnp.maximum(sx0, gx0), 0.0)
    ih = jnp.maximum(jnp.minimum(sy1, gy1) - jnp.maximum(sy0, gy0), 0.0)
    inter = iw * ih
    union = area_s + area_g - inter
    iou = inter / union
    ew = jnp.maximum(jnp.maximum(sx1, gx1) - jnp.minimum(sx0, gx0), 0.0)
    eh = jnp.maximum(jnp.maximum(sy1, gy1) - jnp.minimum(sy0, gy0), 0.0)
    earea = ew * eh
    giou = iou - (earea - union) / earea
    # jnp.where (not multiply) so NaNs from padded rows (0/0) never propagate.
    giou_sum = jnp.sum(jnp.where(mask, 1.0 - giou, zero), axis=0, keepdims=True)

    # ------------------------------------------------------------------
    # Accumulate the 7 partial sums into one lane-packed VMEM scratch row.
    # ------------------------------------------------------------------
    lane = jax.lax.broadcasted_iota(jnp.int32, (1, _LANE), 1)

    def put(k, v):
        return jnp.where(lane == k, v, 0.0)

    acc_ref[...] += (put(0, ce_num) + put(1, ce_den) + put(2, n_correct)
                     + put(3, bce_sum) + put(4, logp_total)
                     + put(5, bbox_sum) + put(6, giou_sum))

    # ------------------------------------------------------------------
    # Finalize: single divide per loss, pack 5 scalars lane-dense.
    # ------------------------------------------------------------------
    @pl.when(i == n_steps - 1)
    def _():
        acc = acc_ref[...]
        inv_b = 1.0 / float(total_b)
        loss_ce = acc[:, 0:1] / acc[:, 1:2]
        class_error = 100.0 - acc[:, 2:3] * (100.0 * inv_b)
        loss_bce = -(acc[:, 3:4] * inv_b)
        bad = jnp.isnan(loss_bce) | jnp.isinf(loss_bce)
        # Matches the PyTorch fallback: zeros_like(loss) * src_probs.log().sum()
        loss_bce = jnp.where(bad, 0.0 * acc[:, 4:5], loss_bce)
        inv_nb = 1.0 / float(num_boxes)
        loss_bbox = acc[:, 5:6] * inv_nb
        loss_giou = acc[:, 6:7] * inv_nb

        out_ref[...] = (put(0, loss_ce)
                        + put(1, class_error)
                        + put(2, loss_bce)
                        + put(3, loss_bbox)
                        + put(4, loss_giou))


def make_loss_criterion(num_classes: int, eos_coef: float, *, block_rows: int = 1024):
    """Returns a function mimicking LossCriterion.forward for
    losses = ['labels', 'attr_labels', 'boxes']."""
    c1 = num_classes + 1

    def forward(outputs, targets):
        src_logits = outputs['pred_logits'][:, 0].astype(jnp.float32)        # [B, C1]
        src_probs = outputs['outputs_mclass_prob'][:, 0].astype(jnp.float32)  # [B, A]
        src_boxes = outputs['pred_boxes'][:, 0].astype(jnp.float32)           # [B, 4]

        cls_labels = jnp.asarray(targets['cls_labels'], jnp.int32).reshape(-1, 1)
        attr_labels = jnp.asarray(targets['attr_labels'], jnp.float32)
        gt_boxes = jnp.asarray(targets['gt_boxes'], jnp.float32)

        B, C1 = src_logits.shape
        A = src_probs.shape[1]
        assert C1 == c1, "pred_logits last dim must be num_classes + 1"

        # Batch block: multiple of 8 sublanes, capped so 2 buffers per input stay
        # far below the v7x 32 MiB scoped-VMEM default.
        tm = min(int(block_rows), _round_up(B, 8))
        tm = _round_up(tm, 8)
        padded_b = _round_up(B, tm)
        grid = padded_b // tm

        def pad_rows(x):
            if x.shape[0] == padded_b:
                return x
            return jnp.pad(x, ((0, padded_b - x.shape[0]),) + ((0, 0),) * (x.ndim - 1))

        args = (pad_rows(src_logits), pad_rows(src_probs), pad_rows(src_boxes),
                pad_rows(cls_labels), pad_rows(attr_labels), pad_rows(gt_boxes))

        def spec(width):
            return pl.BlockSpec((tm, width), lambda i: (i, 0))

        # num_boxes=1.0 matches the module: forward() never passes num_boxes,
        # so loss_boxes uses its default of 1.
        kernel = functools.partial(
            _loss_kernel, eos_coef=float(eos_coef), num_boxes=1.0,
            total_b=int(B), block_rows=int(tm))

        packed = pl.pallas_call(
            kernel,
            out_shape=jax.ShapeDtypeStruct((1, _LANE), jnp.float32),
            grid=(grid,),
            in_specs=[spec(C1), spec(A), spec(4), spec(1), spec(A), spec(4)],
            out_specs=pl.BlockSpec((1, _LANE), lambda i: (0, 0)),
            scratch_shapes=[pltpu.VMEM((1, _LANE), jnp.float32)],
            compiler_params=pltpu.CompilerParams(
                dimension_semantics=("arbitrary",)),
        )(*args)

        return {
            'loss_ce': packed[0, 0],
            'class_error': packed[0, 1],
            'loss_BCE': packed[0, 2],
            'loss_bbox': packed[0, 3],
            'loss_giou': packed[0, 4],
        }

    return forward


def _reference(outputs, targets, num_classes, eos_coef):
    """Pure-jnp reference for sanity checking."""
    c1 = num_classes + 1
    w = jnp.ones((c1,), jnp.float32).at[-1].set(eos_coef)
    logits = outputs['pred_logits'][:, 0]
    labels = jnp.asarray(targets['cls_labels'], jnp.int32)
    logp = jax.nn.log_softmax(logits, axis=-1)
    picked = jnp.take_along_axis(logp, labels[:, None], axis=1)[:, 0]
    wi = w[labels]
    loss_ce = jnp.sum(-picked * wi) / jnp.sum(wi)
    acc = jnp.mean((jnp.argmax(logits, axis=1) == labels).astype(jnp.float32)) * 100.0
    class_error = 100.0 - acc

    p = outputs['outputs_mclass_prob'][:, 0]
    t = jnp.asarray(targets['attr_labels'], jnp.float32)
    wt_pos = t.sum(1) + 0.001
    wt_neg = (1 - t).sum(1)
    loss_bce = -((jnp.log(p) * t).sum(1) / wt_pos
                 + (jnp.log(1 - p) * (1 - t)).sum(1) / wt_neg).mean()

    sb = outputs['pred_boxes'][:, 0]
    gb = jnp.asarray(targets['gt_boxes'], jnp.float32)
    loss_bbox = jnp.abs(sb - gb).sum()

    def xyxy(b):
        cx, cy, wd, ht = b[:, 0], b[:, 1], b[:, 2], b[:, 3]
        return cx - wd / 2, cy - ht / 2, cx + wd / 2, cy + ht / 2
    sx0, sy0, sx1, sy1 = xyxy(sb)
    gx0, gy0, gx1, gy1 = xyxy(gb)
    inter = (jnp.maximum(jnp.minimum(sx1, gx1) - jnp.maximum(sx0, gx0), 0)
             * jnp.maximum(jnp.minimum(sy1, gy1) - jnp.maximum(sy0, gy0), 0))
    union = (sx1 - sx0) * (sy1 - sy0) + (gx1 - gx0) * (gy1 - gy0) - inter
    iou = inter / union
    earea = (jnp.maximum(sx1, gx1) - jnp.minimum(sx0, gx0)) \
        * (jnp.maximum(sy1, gy1) - jnp.minimum(sy0, gy0))
    giou = iou - (earea - union) / earea
    loss_giou = jnp.sum(1.0 - giou)
    return {'loss_ce': loss_ce, 'class_error': class_error, 'loss_BCE': loss_bce,
            'loss_bbox': loss_bbox, 'loss_giou': loss_giou}


if __name__ == "__main__":
    # B=20 with block_rows=8 exercises a 3-step grid AND a masked partial block.
    B, Q, NUM_CLASSES, A = 20, 2, 4, 16
    C1 = NUM_CLASSES + 1
    EOS_COEF = 0.1

    key = jax.random.PRNGKey(0)
    k1, k2, k3, k4, k5, k6, k7 = jax.random.split(key, 7)

    pred_logits = jax.random.normal(k1, (B, Q, C1), jnp.float32)
    mclass_prob = jax.nn.sigmoid(jax.random.normal(k2, (B, Q, A), jnp.float32))
    pred_boxes = jnp.concatenate(
        [jax.random.uniform(k3, (B, Q, 2), minval=0.3, maxval=0.7),
         jax.random.uniform(k4, (B, Q, 2), minval=0.1, maxval=0.4)], axis=-1)

    cls_labels = jax.random.randint(k5, (B,), 0, C1)
    attr_labels = (jax.random.uniform(k6, (B, A)) > 0.5).astype(jnp.float32)
    gt_boxes = jnp.concatenate(
        [jax.random.uniform(k7, (B, 2), minval=0.3, maxval=0.7),
         jax.random.uniform(jax.random.fold_in(k7, 1), (B, 2), minval=0.1, maxval=0.4)],
        axis=-1)

    outputs = {'pred_logits': pred_logits,
               'outputs_mclass_prob': mclass_prob,
               'pred_boxes': pred_boxes}
    targets = {'cls_labels': cls_labels,
               'attr_labels': attr_labels,
               'gt_boxes': gt_boxes}

    criterion = make_loss_criterion(NUM_CLASSES, EOS_COEF, block_rows=8)
    losses = criterion(outputs, targets)
    losses = jax.block_until_ready(losses)

    ref = _reference(outputs, targets, NUM_CLASSES, EOS_COEF)
    for k in losses:
        assert jnp.allclose(losses[k], ref[k], rtol=1e-3, atol=1e-3), (
            f"mismatch in {k}: {losses[k]} vs {ref[k]}")

    print("KERNEL_OK")
</pallas_src>

<mosaic_0001>
module attributes {stable_mosaic.version = 11 : i64} {
  func.func @_loss_kernel(%arg0: i32, %arg1: memref<8x5xf32, #tpu.memory_space<vmem>>, %arg2: memref<8x16xf32, #tpu.memory_space<vmem>>, %arg3: memref<8x4xf32, #tpu.memory_space<vmem>>, %arg4: memref<8x1xi32, #tpu.memory_space<vmem>>, %arg5: memref<8x16xf32, #tpu.memory_space<vmem>>, %arg6: memref<8x4xf32, #tpu.memory_space<vmem>>, %arg7: memref<1x128xf32, #tpu.memory_space<vmem>>, %arg8: memref<1x128xf32, #tpu.memory_space<vmem>>) attributes {dimension_semantics = [#tpu.dimension_semantics<arbitrary>], iteration_bounds = array<i64: 3>, scalar_prefetch = 0 : i64, scratch_operands = 1 : i64, tpu.core_type = #tpu.core_type<tc>, window_params = [{transform_indices = @transform_0, window_bounds = array<i64: 8, 5>}, {transform_indices = @transform_1, window_bounds = array<i64: 8, 16>}, {transform_indices = @transform_2, window_bounds = array<i64: 8, 4>}, {transform_indices = @transform_3, window_bounds = array<i64: 8, 1>}, {transform_indices = @transform_4, window_bounds = array<i64: 8, 16>}, {transform_indices = @transform_5, window_bounds = array<i64: 8, 4>}, {pipeline_mode = #tpu.pipeline_mode<synchronous>, transform_indices = @transform_6, window_bounds = array<i64: 1, 128>}]} {
    %c0_i32 = arith.constant 0 : i32
    %0 = arith.cmpi eq, %arg0, %c0_i32 : i32
    %1 = arith.extui %0 : i1 to i32
    %c0_i32_0 = arith.constant 0 : i32
    %2 = arith.cmpi ne, %1, %c0_i32_0 : i32
    scf.if %2 {
      %cst_66 = arith.constant 0.000000e+00 : f32
      %228 = vector.broadcast %cst_66 : f32 to vector<1x128xf32>
      %c0_67 = arith.constant 0 : index
      %c0_68 = arith.constant 0 : index
      %229 = vector.load %arg8[%c0_67, %c0_68] : memref<1x128xf32, #tpu.memory_space<vmem>>, vector<1x128xf32>
      tpu.vector_store %arg8[%c0_67, %c0_68], %228 {strides = array<i32>} : memref<1x128xf32, #tpu.memory_space<vmem>>, vector<1x128xf32>,
    } else {
    }
    %c0 = arith.constant 0 : index
    %c0_1 = arith.constant 0 : index
    %3 = vector.load %arg1[%c0, %c0_1] : memref<8x5xf32, #tpu.memory_space<vmem>>, vector<8x5xf32>
    %c0_2 = arith.constant 0 : index
    %c0_3 = arith.constant 0 : index
    %4 = vector.load %arg2[%c0_2, %c0_3] : memref<8x16xf32, #tpu.memory_space<vmem>>, vector<8x16xf32>
    %c0_4 = arith.constant 0 : index
    %c0_5 = arith.constant 0 : index
    %5 = vector.load %arg3[%c0_4, %c0_5] : memref<8x4xf32, #tpu.memory_space<vmem>>, vector<8x4xf32>
    %c0_6 = arith.constant 0 : index
    %c0_7 = arith.constant 0 : index
    %6 = vector.load %arg4[%c0_6, %c0_7] : memref<8x1xi32, #tpu.memory_space<vmem>>, vector<8x1xi32>
    %c0_8 = arith.constant 0 : index
    %c0_9 = arith.constant 0 : index
    %7 = vector.load %arg5[%c0_8, %c0_9] : memref<8x16xf32, #tpu.memory_space<vmem>>, vector<8x16xf32>
    %c0_10 = arith.constant 0 : index
    %c0_11 = arith.constant 0 : index
    %8 = vector.load %arg6[%c0_10, %c0_11] : memref<8x4xf32, #tpu.memory_space<vmem>>, vector<8x4xf32>
    %9 = tpu.iota {dimensions = array<i32: 0>} : vector<8x1xi32>
    %c8_i32 = arith.constant 8 : i32
    %10 = arith.muli %arg0, %c8_i32 : i32
    %11 = vector.broadcast %10 : i32 to vector<8x1xi32>
    %12 = arith.addi %9, %11 : vector<8x1xi32>
    %c20_i32 = arith.constant 20 : i32
    %13 = vector.broadcast %c20_i32 : i32 to vector<8x1xi32>
    %14 = arith.cmpi slt, %12, %13 : vector<8x1xi32>
    %cst = arith.constant 0.000000e+00 : f32
    %15 = vector.broadcast %cst : f32 to vector<8x1xf32>
    %cst_12 = arith.constant dense<0xFF800000> : vector<8xf32>
    %16 = vector.multi_reduction <maximumf>, %3, %cst_12 [1] : vector<8x5xf32> to vector<8xf32>
    %17 = vector.shape_cast %16 : vector<8xf32> to vector<8x1xf32>
    %18 = vector.broadcast %17 : vector<8x1xf32> to vector<8x5xf32>
    %19 = arith.subf %3, %18 : vector<8x5xf32>
    %20 = math.exp %19 : vector<8x5xf32>
    %cst_13 = arith.constant dense<0.000000e+00> : vector<8xf32>
    %21 = vector.multi_reduction <add>, %20, %cst_13 [1] : vector<8x5xf32> to vector<8xf32>
    %22 = vector.shape_cast %21 : vector<8xf32> to vector<8x1xf32>
    %23 = math.log %22 : vector<8x1xf32>
    %24 = vector.broadcast %23 : vector<8x1xf32> to vector<8x5xf32>
    %25 = arith.subf %19, %24 : vector<8x5xf32>
    %26 = tpu.iota {dimensions = array<i32: 1>} : vector<8x5xi32>
    %27 = vector.broadcast %6 : vector<8x1xi32> to vector<8x5xi32>
    %28 = arith.cmpi eq, %26, %27 : vector<8x5xi32>
    %29 = arith.extui %28 : vector<8x5xi1> to vector<8x5xi32>
    %30 = arith.sitofp %29 : vector<8x5xi32> to vector<8x5xf32>
    %31 = arith.mulf %25, %30 : vector<8x5xf32>
    %cst_14 = arith.constant dense<0.000000e+00> : vector<8xf32>
    %32 = vector.multi_reduction <add>, %31, %cst_14 [1] : vector<8x5xf32> to vector<8xf32>
    %33 = vector.shape_cast %32 : vector<8xf32> to vector<8x1xf32>
    %c4_i32 = arith.constant 4 : i32
    %34 = vector.broadcast %c4_i32 : i32 to vector<8x1xi32>
    %35 = arith.cmpi eq, %6, %34 : vector<8x1xi32>
    %cst_15 = arith.constant 1.000000e-01 : f32
    %cst_16 = arith.constant 1.000000e+00 : f32
    %36 = vector.broadcast %cst_15 : f32 to vector<8x1xf32>
    %37 = vector.broadcast %cst_16 : f32 to vector<8x1xf32>
    %38 = arith.select %35, %36, %37 : vector<8x1xi1>, vector<8x1xf32>
    %cst_17 = arith.constant 0.000000e+00 : f32
    %39 = vector.broadcast %cst_17 : f32 to vector<8x1xf32>
    %40 = arith.subf %39, %33 : vector<8x1xf32>
    %41 = arith.mulf %40, %38 : vector<8x1xf32>
    %42 = arith.select %14, %41, %15 : vector<8x1xi1>, vector<8x1xf32>
    %cst_18 = arith.constant dense<0.000000e+00> : vector<1xf32>
    %43 = vector.multi_reduction <add>, %42, %cst_18 [0] : vector<8x1xf32> to vector<1xf32>
    %44 = vector.shape_cast %43 : vector<1xf32> to vector<1x1xf32>
    %45 = arith.select %14, %38, %15 : vector<8x1xi1>, vector<8x1xf32>
    %cst_19 = arith.constant dense<0.000000e+00> : vector<1xf32>
    %46 = vector.multi_reduction <add>, %45, %cst_19 [0] : vector<8x1xf32> to vector<1xf32>
    %47 = vector.shape_cast %46 : vector<1xf32> to vector<1x1xf32>
    %48 = vector.broadcast %17 : vector<8x1xf32> to vector<8x5xf32>
    %49 = arith.cmpf oeq, %3, %48 : vector<8x5xf32>
    %c5_i32 = arith.constant 5 : i32
    %50 = vector.broadcast %c5_i32 : i32 to vector<8x5xi32>
    %51 = arith.select %49, %26, %50 : vector<8x5xi1>, vector<8x5xi32>
    %cst_20 = arith.constant dense<2147483647> : vector<8xi32>
    %52 = vector.multi_reduction <minsi>, %51, %cst_20 [1] : vector<8x5xi32> to vector<8xi32>
    %53 = vector.shape_cast %52 : vector<8xi32> to vector<8x1xi32>
    %54 = arith.cmpi eq, %53, %6 : vector<8x1xi32>
    %55 = arith.extui %54 : vector<8x1xi1> to vector<8x1xi32>
    %56 = arith.sitofp %55 : vector<8x1xi32> to vector<8x1xf32>
    %57 = arith.select %14, %56, %15 : vector<8x1xi1>, vector<8x1xf32>
    %cst_21 = arith.constant dense<0.000000e+00> : vector<1xf32>
    %58 = vector.multi_reduction <add>, %57, %cst_21 [0] : vector<8x1xf32> to vector<1xf32>
    %59 = vector.shape_cast %58 : vector<1xf32> to vector<1x1xf32>
    %cst_22 = arith.constant 5.000000e-01 : f32
    %60 = vector.shape_cast %14 : vector<8x1xi1> to vector<8x1xi1>
    %61 = vector.broadcast %60 : vector<8x1xi1> to vector<8x16xi1>
    %62 = vector.broadcast %cst_22 : f32 to vector<8x16xf32>
    %63 = arith.select %61, %4, %62 : vector<8x16xi1>, vector<8x16xf32>
    %64 = math.log %63 : vector<8x16xf32>
    %cst_23 = arith.constant 1.000000e+00 : f32
    %65 = vector.broadcast %cst_23 : f32 to vector<8x16xf32>
    %66 = arith.subf %65, %63 : vector<8x16xf32>
    %67 = math.log %66 : vector<8x16xf32>
    %cst_24 = arith.constant dense<0.000000e+00> : vector<8xf32>
    %68 = vector.multi_reduction <add>, %7, %cst_24 [1] : vector<8x16xf32> to vector<8xf32>
    %69 = vector.shape_cast %68 : vector<8xf32> to vector<8x1xf32>
    %cst_25 = arith.constant 1.000000e-03 : f32
    %70 = vector.broadcast %cst_25 : f32 to vector<8x1xf32>
    %71 = arith.addf %69, %70 : vector<8x1xf32>
    %cst_26 = arith.constant 1.000000e+00 : f32
    %72 = vector.broadcast %cst_26 : f32 to vector<8x16xf32>
    %73 = arith.subf %72, %7 : vector<8x16xf32>
    %cst_27 = arith.constant dense<0.000000e+00> : vector<8xf32>
    %74 = vector.multi_reduction <add>, %73, %cst_27 [1] : vector<8x16xf32> to vector<8xf32>
    %75 = vector.shape_cast %74 : vector<8xf32> to vector<8x1xf32>
    %76 = arith.mulf %64, %7 : vector<8x16xf32>
    %cst_28 = arith.constant dense<0.000000e+00> : vector<8xf32>
    %77 = vector.multi_reduction <add>, %76, %cst_28 [1] : vector<8x16xf32> to vector<8xf32>
    %78 = vector.shape_cast %77 : vector<8xf32> to vector<8x1xf32>
    %79 = arith.divf %78, %71 : vector<8x1xf32>
    %cst_29 = arith.constant 1.000000e+00 : f32
    %80 = vector.broadcast %cst_29 : f32 to vector<8x16xf32>
    %81 = arith.subf %80, %7 : vector<8x16xf32>
    %82 = arith.mulf %67, %81 : vector<8x16xf32>
    %cst_30 = arith.constant dense<0.000000e+00> : vector<8xf32>
    %83 = vector.multi_reduction <add>, %82, %cst_30 [1] : vector<8x16xf32> to vector<8xf32>
    %84 = vector.shape_cast %83 : vector<8xf32> to vector<8x1xf32>
    %85 = arith.divf %84, %75 : vector<8x1xf32>
    %86 = arith.addf %79, %85 : vector<8x1xf32>
    %87 = arith.select %14, %86, %15 : vector<8x1xi1>, vector<8x1xf32>
    %cst_31 = arith.constant dense<0.000000e+00> : vector<1xf32>
    %88 = vector.multi_reduction <add>, %87, %cst_31 [0] : vector<8x1xf32> to vector<1xf32>
    %89 = vector.shape_cast %88 : vector<1xf32> to vector<1x1xf32>
    %cst_32 = arith.constant dense<0.000000e+00> : vector<8xf32>
    %90 = vector.multi_reduction <add>, %64, %cst_32 [1] : vector<8x16xf32> to vector<8xf32>
    %91 = vector.shape_cast %90 : vector<8xf32> to vector<8x1xf32>
    %92 = arith.select %14, %91, %15 : vector<8x1xi1>, vector<8x1xf32>
    %cst_33 = arith.constant dense<0.000000e+00> : vector<1xf32>
    %93 = vector.multi_reduction <add>, %92, %cst_33 [0] : vector<8x1xf32> to vector<1xf32>
    %94 = vector.shape_cast %93 : vector<1xf32> to vector<1x1xf32>
    %95 = arith.subf %5, %8 : vector<8x4xf32>
    %96 = math.absf %95 : vector<8x4xf32>
    %cst_34 = arith.constant dense<0.000000e+00> : vector<8xf32>
    %97 = vector.multi_reduction <add>, %96, %cst_34 [1] : vector<8x4xf32> to vector<8xf32>
    %98 = vector.shape_cast %97 : vector<8xf32> to vector<8x1xf32>
    %99 = arith.select %14, %98, %15 : vector<8x1xi1>, vector<8x1xf32>
    %cst_35 = arith.constant dense<0.000000e+00> : vector<1xf32>
    %100 = vector.multi_reduction <add>, %99, %cst_35 [0] : vector<8x1xf32> to vector<1xf32>
    %101 = vector.shape_cast %100 : vector<1xf32> to vector<1x1xf32>
    %102 = vector.extract_strided_slice %5 {offsets = [0, 0], sizes = [8, 1], strides = [1, 1]} : vector<8x4xf32> to vector<8x1xf32>
    %103 = vector.extract_strided_slice %5 {offsets = [0, 1], sizes = [8, 1], strides = [1, 1]} : vector<8x4xf32> to vector<8x1xf32>
    %104 = vector.extract_strided_slice %5 {offsets = [0, 2], sizes = [8, 1], strides = [1, 1]} : vector<8x4xf32> to vector<8x1xf32>
    %105 = vector.extract_strided_slice %5 {offsets = [0, 3], sizes = [8, 1], strides = [1, 1]} : vector<8x4xf32> to vector<8x1xf32>
    %cst_36 = arith.constant 5.000000e-01 : f32
    %106 = vector.broadcast %cst_36 : f32 to vector<8x1xf32>
    %107 = arith.mulf %106, %104 : vector<8x1xf32>
    %108 = arith.subf %102, %107 : vector<8x1xf32>
    %cst_37 = arith.constant 5.000000e-01 : f32
    %109 = vector.broadcast %cst_37 : f32 to vector<8x1xf32>
    %110 = arith.mulf %109, %105 : vector<8x1xf32>
    %111 = arith.subf %103, %110 : vector<8x1xf32>
    %cst_38 = arith.constant 5.000000e-01 : f32
    %112 = vector.broadcast %cst_38 : f32 to vector<8x1xf32>
    %113 = arith.mulf %112, %104 : vector<8x1xf32>
    %114 = arith.addf %102, %113 : vector<8x1xf32>
    %cst_39 = arith.constant 5.000000e-01 : f32
    %115 = vector.broadcast %cst_39 : f32 to vector<8x1xf32>
    %116 = arith.mulf %115, %105 : vector<8x1xf32>
    %117 = arith.addf %103, %116 : vector<8x1xf32>
    %118 = vector.extract_strided_slice %8 {offsets = [0, 0], sizes = [8, 1], strides = [1, 1]} : vector<8x4xf32> to vector<8x1xf32>
    %119 = vector.extract_strided_slice %8 {offsets = [0, 1], sizes = [8, 1], strides = [1, 1]} : vector<8x4xf32> to vector<8x1xf32>
    %120 = vector.extract_strided_slice %8 {offsets = [0, 2], sizes = [8, 1], strides = [1, 1]} : vector<8x4xf32> to vector<8x1xf32>
    %121 = vector.extract_strided_slice %8 {offsets = [0, 3], sizes = [8, 1], strides = [1, 1]} : vector<8x4xf32> to vector<8x1xf32>
    %cst_40 = arith.constant 5.000000e-01 : f32
    %122 = vector.broadcast %cst_40 : f32 to vector<8x1xf32>
    %123 = arith.mulf %122, %120 : vector<8x1xf32>
    %124 = arith.subf %118, %123 : vector<8x1xf32>
    %cst_41 = arith.constant 5.000000e-01 : f32
    %125 = vector.broadcast %cst_41 : f32 to vector<8x1xf32>
    %126 = arith.mulf %125, %121 : vector<8x1xf32>
    %127 = arith.subf %119, %126 : vector<8x1xf32>
    %cst_42 = arith.constant 5.000000e-01 : f32
    %128 = vector.broadcast %cst_42 : f32 to vector<8x1xf32>
    %129 = arith.mulf %128, %120 : vector<8x1xf32>
    %130 = arith.addf %118, %129 : vector<8x1xf32>
    %cst_43 = arith.constant 5.000000e-01 : f32
    %131 = vector.broadcast %cst_43 : f32 to vector<8x1xf32>
    %132 = arith.mulf %131, %121 : vector<8x1xf32>
    %133 = arith.addf %119, %132 : vector<8x1xf32>
    %134 = arith.subf %114, %108 : vector<8x1xf32>
    %135 = arith.subf %117, %111 : vector<8x1xf32>
    %136 = arith.mulf %134, %135 : vector<8x1xf32>
    %137 = arith.subf %130, %124 : vector<8x1xf32>
    %138 = arith.subf %133, %127 : vector<8x1xf32>
    %139 = arith.mulf %137, %138 : vector<8x1xf32>
    %140 = arith.minimumf %114, %130 : vector<8x1xf32>
    %141 = arith.maximumf %108, %124 : vector<8x1xf32>
    %142 = arith.subf %140, %141 : vector<8x1xf32>
    %cst_44 = arith.constant 0.000000e+00 : f32
    %143 = vector.broadcast %cst_44 : f32 to vector<8x1xf32>
    %144 = arith.maximumf %142, %143 : vector<8x1xf32>
    %145 = arith.minimumf %117, %133 : vector<8x1xf32>
    %146 = arith.maximumf %111, %127 : vector<8x1xf32>
    %147 = arith.subf %145, %146 : vector<8x1xf32>
    %cst_45 = arith.constant 0.000000e+00 : f32
    %148 = vector.broadcast %cst_45 : f32 to vector<8x1xf32>
    %149 = arith.maximumf %147, %148 : vector<8x1xf32>
    %150 = arith.mulf %144, %149 : vector<8x1xf32>
    %151 = arith.addf %136, %139 : vector<8x1xf32>
    %152 = arith.subf %151, %150 : vector<8x1xf32>
    %153 = arith.divf %150, %152 : vector<8x1xf32>
    %154 = arith.maximumf %114, %130 : vector<8x1xf32>
    %155 = arith.minimumf %108, %124 : vector<8x1xf32>
    %156 = arith.subf %154, %155 : vector<8x1xf32>
    %cst_46 = arith.constant 0.000000e+00 : f32
    %157 = vector.broadcast %cst_46 : f32 to vector<8x1xf32>
    %158 = arith.maximumf %156, %157 : vector<8x1xf32>
    %159 = arith.maximumf %117, %133 : vector<8x1xf32>
    %160 = arith.minimumf %111, %127 : vector<8x1xf32>
    %161 = arith.subf %159, %160 : vector<8x1xf32>
    %cst_47 = arith.constant 0.000000e+00 : f32
    %162 = vector.broadcast %cst_47 : f32 to vector<8x1xf32>
    %163 = arith.maximumf %161, %162 : vector<8x1xf32>
    %164 = arith.mulf %158, %163 : vector<8x1xf32>
    %165 = arith.subf %164, %152 : vector<8x1xf32>
    %166 = arith.divf %165, %164 : vector<8x1xf32>
    %167 = arith.subf %153, %166 : vector<8x1xf32>
    %cst_48 = arith.constant 1.000000e+00 : f32
    %168 = vector.broadcast %cst_48 : f32 to vector<8x1xf32>
    %169 = arith.subf %168, %167 : vector<8x1xf32>
    %170 = arith.select %14, %169, %15 : vector<8x1xi1>, vector<8x1xf32>
    %cst_49 = arith.constant dense<0.000000e+00> : vector<1xf32>
    %171 = vector.multi_reduction <add>, %170, %cst_49 [0] : vector<8x1xf32> to vector<1xf32>
    %172 = vector.shape_cast %171 : vector<1xf32> to vector<1x1xf32>
    %173 = tpu.iota {dimensions = array<i32: 1>} : vector<1x128xi32>
    %c0_50 = arith.constant 0 : index
    %c0_51 = arith.constant 0 : index
    %174 = vector.load %arg8[%c0_50, %c0_51] : memref<1x128xf32, #tpu.memory_space<vmem>>, vector<1x128xf32>
    %c0_i32_52 = arith.constant 0 : i32
    %175 = vector.broadcast %c0_i32_52 : i32 to vector<1x128xi32>
    %176 = arith.cmpi eq, %173, %175 : vector<1x128xi32>
    %cst_53 = arith.constant 0.000000e+00 : f32
    %177 = vector.shape_cast %44 : vector<1x1xf32> to vector<1x1xf32>
    %178 = vector.broadcast %177 : vector<1x1xf32> to vector<1x128xf32>
    %179 = vector.broadcast %cst_53 : f32 to vector<1x128xf32>
    %180 = arith.select %176, %178, %179 : vector<1x128xi1>, vector<1x128xf32>
    %c1_i32 = arith.constant 1 : i32
    %181 = vector.broadcast %c1_i32 : i32 to vector<1x128xi32>
    %182 = arith.cmpi eq, %173, %181 : vector<1x128xi32>
    %cst_54 = arith.constant 0.000000e+00 : f32
    %183 = vector.shape_cast %47 : vector<1x1xf32> to vector<1x1xf32>
    %184 = vector.broadcast %183 : vector<1x1xf32> to vector<1x128xf32>
    %185 = vector.broadcast %cst_54 : f32 to vector<1x128xf32>
    %186 = arith.select %182, %184, %185 : vector<1x128xi1>, vector<1x128xf32>
    %187 = arith.addf %180, %186 : vector<1x128xf32>
    %c2_i32 = arith.constant 2 : i32
    %188 = vector.broadcast %c2_i32 : i32 to vector<1x128xi32>
    %189 = arith.cmpi eq, %173, %188 : vector<1x128xi32>
    %cst_55 = arith.constant 0.000000e+00 : f32
    %190 = vector.shape_cast %59 : vector<1x1xf32> to vector<1x1xf32>
    %191 = vector.broadcast %190 : vector<1x1xf32> to vector<1x128xf32>
    %192 = vector.broadcast %cst_55 : f32 to vector<1x128xf32>
    %193 = arith.select %189, %191, %192 : vector<1x128xi1>, vector<1x128xf32>
    %194 = arith.addf %187, %193 : vector<1x128xf32>
    %c3_i32 = arith.constant 3 : i32
    %195 = vector.broadcast %c3_i32 : i32 to vector<1x128xi32>
    %196 = arith.cmpi eq, %173, %195 : vector<1x128xi32>
    %cst_56 = arith.constant 0.000000e+00 : f32
    %197 = vector.shape_cast %89 : vector<1x1xf32> to vector<1x1xf32>
    %198 = vector.broadcast %197 : vector<1x1xf32> to vector<1x128xf32>
    %199 = vector.broadcast %cst_56 : f32 to vector<1x128xf32>
    %200 = arith.select %196, %198, %199 : vector<1x128xi1>, vector<1x128xf32>
    %201 = arith.addf %194, %200 : vector<1x128xf32>
    %c4_i32_57 = arith.constant 4 : i32
    %202 = vector.broadcast %c4_i32_57 : i32 to vector<1x128xi32>
    %203 = arith.cmpi eq, %173, %202 : vector<1x128xi32>
    %cst_58 = arith.constant 0.000000e+00 : f32
    %204 = vector.shape_cast %94 : vector<1x1xf32> to vector<1x1xf32>
    %205 = vector.broadcast %204 : vector<1x1xf32> to vector<1x128xf32>
    %206 = vector.broadcast %cst_58 : f32 to vector<1x128xf32>
    %207 = arith.select %203, %205, %206 : vector<1x128xi1>, vector<1x128xf32>
    %208 = arith.addf %201, %207 : vector<1x128xf32>
    %c5_i32_59 = arith.constant 5 : i32
    %209 = vector.broadcast %c5_i32_59 : i32 to vector<1x128xi32>
    %210 = arith.cmpi eq, %173, %209 : vector<1x128xi32>
    %cst_60 = arith.constant 0.000000e+00 : f32
    %211 = vector.shape_cast %101 : vector<1x1xf32> to vector<1x1xf32>
    %212 = vector.broadcast %211 : vector<1x1xf32> to vector<1x128xf32>
    %213 = vector.broadcast %cst_60 : f32 to vector<1x128xf32>
    %214 = arith.select %210, %212, %213 : vector<1x128xi1>, vector<1x128xf32>
    %215 = arith.addf %208, %214 : vector<1x128xf32>
    %c6_i32 = arith.constant 6 : i32
    %216 = vector.broadcast %c6_i32 : i32 to vector<1x128xi32>
    %217 = arith.cmpi eq, %173, %216 : vector<1x128xi32>
    %cst_61 = arith.constant 0.000000e+00 : f32
    %218 = vector.shape_cast %172 : vector<1x1xf32> to vector<1x1xf32>
    %219 = vector.broadcast %218 : vector<1x1xf32> to vector<1x128xf32>
    %220 = vector.broadcast %cst_61 : f32 to vector<1x128xf32>
    %221 = arith.select %217, %219, %220 : vector<1x128xi1>, vector<1x128xf32>
    %222 = arith.addf %215, %221 : vector<1x128xf32>
    %223 = arith.addf %174, %222 : vector<1x128xf32>
    %c0_62 = arith.constant 0 : index
    %c0_63 = arith.constant 0 : index
    %224 = vector.load %arg8[%c0_62, %c0_63] : memref<1x128xf32, #tpu.memory_space<vmem>>, vector<1x128xf32>
    tpu.vector_store %arg8[%c0_62, %c0_63], %223 {strides = array<i32>} : memref<1x128xf32, #tpu.memory_space<vmem>>, vector<1x128xf32>,
    %c2_i32_64 = arith.constant 2 : i32
    %225 = arith.cmpi eq, %arg0, %c2_i32_64 : i32
    %226 = arith.extui %225 : i1 to i32
    %c0_i32_65 = arith.constant 0 : i32
    %227 = arith.cmpi ne, %226, %c0_i32_65 : i32
    scf.if %227 {
      %c0_66 = arith.constant 0 : index
      %c0_67 = arith.constant 0 : index
      %228 = vector.load %arg8[%c0_66, %c0_67] : memref<1x128xf32, #tpu.memory_space<vmem>>, vector<1x128xf32>
      %229 = vector.extract_strided_slice %228 {offsets = [0, 0], sizes = [1, 1], strides = [1, 1]} : vector<1x128xf32> to vector<1x1xf32>
      %230 = vector.extract_strided_slice %228 {offsets = [0, 1], sizes = [1, 1], strides = [1, 1]} : vector<1x128xf32> to vector<1x1xf32>
      %231 = arith.divf %229, %230 : vector<1x1xf32>
      %232 = vector.extract_strided_slice %228 {offsets = [0, 2], sizes = [1, 1], strides = [1, 1]} : vector<1x128xf32> to vector<1x1xf32>
      %cst_68 = arith.constant 5.000000e+00 : f32
      %233 = vector.broadcast %cst_68 : f32 to vector<1x1xf32>
      %234 = arith.mulf %232, %233 : vector<1x1xf32>
      %cst_69 = arith.constant 1.000000e+02 : f32
      %235 = vector.broadcast %cst_69 : f32 to vector<1x1xf32>
      %236 = arith.subf %235, %234 : vector<1x1xf32>
      %237 = vector.extract_strided_slice %228 {offsets = [0, 3], sizes = [1, 1], strides = [1, 1]} : vector<1x128xf32> to vector<1x1xf32>
      %cst_70 = arith.constant 5.000000e-02 : f32
      %238 = vector.broadcast %cst_70 : f32 to vector<1x1xf32>
      %239 = arith.mulf %237, %238 : vector<1x1xf32>
      %cst_71 = arith.constant 0.000000e+00 : f32
      %240 = vector.broadcast %cst_71 : f32 to vector<1x1xf32>
      %241 = arith.subf %240, %239 : vector<1x1xf32>
      %242 = arith.cmpf one, %241, %241 : vector<1x1xf32>
      %243 = math.absf %241 : vector<1x1xf32>
      %cst_72 = arith.constant 0x7F800000 : f32
      %244 = vector.broadcast %cst_72 : f32 to vector<1x1xf32>
      %245 = arith.cmpf oeq, %243, %244 : vector<1x1xf32>
      %246 = arith.ori %242, %245 : vector<1x1xi1>
      %247 = vector.extract_strided_slice %228 {offsets = [0, 4], sizes = [1, 1], strides = [1, 1]} : vector<1x128xf32> to vector<1x1xf32>
      %cst_73 = arith.constant 0.000000e+00 : f32
      %248 = vector.broadcast %cst_73 : f32 to vector<1x1xf32>
      %249 = arith.mulf %248, %247 : vector<1x1xf32>
      %250 = arith.select %246, %249, %241 : vector<1x1xi1>, vector<1x1xf32>
      %251 = vector.extract_strided_slice %228 {offsets = [0, 5], sizes = [1, 1], strides = [1, 1]} : vector<1x128xf32> to vector<1x1xf32>
      %cst_74 = arith.constant 1.000000e+00 : f32
      %252 = vector.broadcast %cst_74 : f32 to vector<1x1xf32>
      %253 = arith.mulf %251, %252 : vector<1x1xf32>
      %254 = vector.extract_strided_slice %228 {offsets = [0, 6], sizes = [1, 1], strides = [1, 1]} : vector<1x128xf32> to vector<1x1xf32>
      %cst_75 = arith.constant 1.000000e+00 : f32
      %255 = vector.broadcast %cst_75 : f32 to vector<1x1xf32>
      %256 = arith.mulf %254, %255 : vector<1x1xf32>
      %c0_i32_76 = arith.constant 0 : i32
      %257 = vector.broadcast %c0_i32_76 : i32 to vector<1x128xi32>
      %258 = arith.cmpi eq, %173, %257 : vector<1x128xi32>
      %cst_77 = arith.constant 0.000000e+00 : f32
      %259 = vector.shape_cast %231 : vector<1x1xf32> to vector<1x1xf32>
      %260 = vector.broadcast %259 : vector<1x1xf32> to vector<1x128xf32>
      %261 = vector.broadcast %cst_77 : f32 to vector<1x128xf32>
      %262 = arith.select %258, %260, %261 : vector<1x128xi1>, vector<1x128xf32>
      %c1_i32_78 = arith.constant 1 : i32
      %263 = vector.broadcast %c1_i32_78 : i32 to vector<1x128xi32>
      %264 = arith.cmpi eq, %173, %263 : vector<1x128xi32>
      %cst_79 = arith.constant 0.000000e+00 : f32
      %265 = vector.shape_cast %236 : vector<1x1xf32> to vector<1x1xf32>
      %266 = vector.broadcast %265 : vector<1x1xf32> to vector<1x128xf32>
      %267 = vector.broadcast %cst_79 : f32 to vector<1x128xf32>
      %268 = arith.select %264, %266, %267 : vector<1x128xi1>, vector<1x128xf32>
      %269 = arith.addf %262, %268 : vector<1x128xf32>
      %c2_i32_80 = arith.constant 2 : i32
      %270 = vector.broadcast %c2_i32_80 : i32 to vector<1x128xi32>
      %271 = arith.cmpi eq, %173, %270 : vector<1x128xi32>
      %cst_81 = arith.constant 0.000000e+00 : f32
      %272 = vector.shape_cast %250 : vector<1x1xf32> to vector<1x1xf32>
      %273 = vector.broadcast %272 : vector<1x1xf32> to vector<1x128xf32>
      %274 = vector.broadcast %cst_81 : f32 to vector<1x128xf32>
      %275 = arith.select %271, %273, %274 : vector<1x128xi1>, vector<1x128xf32>
      %276 = arith.addf %269, %275 : vector<1x128xf32>
      %c3_i32_82 = arith.constant 3 : i32
      %277 = vector.broadcast %c3_i32_82 : i32 to vector<1x128xi32>
      %278 = arith.cmpi eq, %173, %277 : vector<1x128xi32>
      %cst_83 = arith.constant 0.000000e+00 : f32
      %279 = vector.shape_cast %253 : vector<1x1xf32> to vector<1x1xf32>
      %280 = vector.broadcast %279 : vector<1x1xf32> to vector<1x128xf32>
      %281 = vector.broadcast %cst_83 : f32 to vector<1x128xf32>
      %282 = arith.select %278, %280, %281 : vector<1x128xi1>, vector<1x128xf32>
      %283 = arith.addf %276, %282 : vector<1x128xf32>
      %c4_i32_84 = arith.constant 4 : i32
      %284 = vector.broadcast %c4_i32_84 : i32 to vector<1x128xi32>
      %285 = arith.cmpi eq, %173, %284 : vector<1x128xi32>
      %cst_85 = arith.constant 0.000000e+00 : f32
      %286 = vector.shape_cast %256 : vector<1x1xf32> to vector<1x1xf32>
      %287 = vector.broadcast %286 : vector<1x1xf32> to vector<1x128xf32>
      %288 = vector.broadcast %cst_85 : f32 to vector<1x128xf32>
      %289 = arith.select %285, %287, %288 : vector<1x128xi1>, vector<1x128xf32>
      %290 = arith.addf %283, %289 : vector<1x128xf32>
      %c0_86 = arith.constant 0 : index
      %c0_87 = arith.constant 0 : index
      %291 = vector.load %arg7[%c0_86, %c0_87] : memref<1x128xf32, #tpu.memory_space<vmem>>, vector<1x128xf32>
      tpu.vector_store %arg7[%c0_86, %c0_87], %290 {strides = array<i32>} : memref<1x128xf32, #tpu.memory_space<vmem>>, vector<1x128xf32>,
    } else {
    }
    return
  }
  func.func @transform_0(%arg0: i32) -> (i32, i32) {
    %c0_i32 = arith.constant 0 : i32
    %c0_i32_0 = arith.constant 0 : i32
    return %arg0, %c0_i32 : i32, i32
  }
  func.func @transform_1(%arg0: i32) -> (i32, i32) {
    %c0_i32 = arith.constant 0 : i32
    %c0_i32_0 = arith.constant 0 : i32
    return %arg0, %c0_i32 : i32, i32
  }
  func.func @transform_2(%arg0: i32) -> (i32, i32) {
    %c0_i32 = arith.constant 0 : i32
    %c0_i32_0 = arith.constant 0 : i32
    return %arg0, %c0_i32 : i32, i32
  }
  func.func @transform_3(%arg0: i32) -> (i32, i32) {
    %c0_i32 = arith.constant 0 : i32
    %c0_i32_0 = arith.constant 0 : i32
    return %arg0, %c0_i32 : i32, i32
  }
  func.func @transform_4(%arg0: i32) -> (i32, i32) {
    %c0_i32 = arith.constant 0 : i32
    %c0_i32_0 = arith.constant 0 : i32
    return %arg0, %c0_i32 : i32, i32
  }
  func.func @transform_5(%arg0: i32) -> (i32, i32) {
    %c0_i32 = arith.constant 0 : i32
    %c0_i32_0 = arith.constant 0 : i32
    return %arg0, %c0_i32 : i32, i32
  }
  func.func @transform_6(%arg0: i32) -> (i32, i32) {
    %c0_i32 = arith.constant 0 : i32
    %c0_i32_0 = arith.constant 0 : i32
    %c0_i32_1 = arith.constant 0 : i32
    return %c0_i32, %c0_i32_0 : i32, i32
  }
}

</mosaic_0001>

<llo_original>
// kernel: tpu_custom_call.1
$region0: #{tpu_custom_call.1}
  #allocation0 [shape = 'u32[]', space=smem, size = 0x4, offset = 0x4, fixed_abs, tag = 'smem constant byte address 0x4 - core index']
  #allocation1 [shape = 'u32[144,128]{1,0:T(1,128)}', space=vmem, size = 0x12000, scoped, tag = 'internal scratch']
  #allocation2 [shape = 'f32[1,128]{1,0:T(1,128)}', space=vmem, size = 0x200, scoped, tag = 'scratch operand']
  %s0 = inlined_call_operand.vmem [shape: f32[24,5], index: 0, kind: input, shape index: {}]
  %s1 = inlined_call_operand.vmem [shape: f32[24,16], index: 1, kind: input, shape index: {}]
  %s2 = inlined_call_operand.vmem [shape: f32[24,4], index: 2, kind: input, shape index: {}]
  %s3 = inlined_call_operand.vmem [shape: s32[24,1], index: 3, kind: input, shape index: {}]
  %s4 = inlined_call_operand.vmem [shape: f32[24,16], index: 4, kind: input, shape index: {}]
  %s5 = inlined_call_operand.vmem [shape: f32[24,4], index: 5, kind: input, shape index: {}]
  %s6 = inlined_call_operand.hbm [shape: f32[1,128], index: 6, kind: output, shape index: {}]
  %s7 = sld [smem:[#allocation0]]
  $region65: #{tpu_custom_call.1} parent=0
    _
  %s9 = ssub.s32 1, %s7
  %s10 = scalar_select 0, %s9, %s7
  $region1: #{tpu_custom_call.1} parent=0
    #allocation3 [shape = 'u8[512]{0}', space=vmem, size = 0x400, scoped, tag = 'output window, operand 0, single buffered']
    #allocation4 [shape = 's32[2]{0}', space=sflag, size = 0x8, scoped, tag = 'scoped memory for tpu_custom_call.1']
    %11 = vsyncpa [#allocation4], 0
    loop: start=0, step=1, limit=5
    $region2: #{tpu_custom_call.1} parent=1 // loop_pre_header
      _
    $region3: #{tpu_custom_call.1} parent=1 // loop_header
      %s13 = sphi 0, %s17
      %p14 = scmp.ge.s32.totalorder %s13, 5
      %s23 = sphi 0, %s25
      %s26 = sphi 0, %s23
      %s27 = sphi 0, %s26
      %s43 = sphi 0, %s27
      %s49 = sphi 0, %s51
      %s52 = sphi 0, %s49
      %s53 = sphi 0, %s52
      %s69 = sphi 0, %s53
      %s75 = sphi 0, %s77
      %s78 = sphi 0, %s75
      %s79 = sphi 0, %s78
      %s95 = sphi 0, %s79
      %s101 = sphi 0, %s103
      %s104 = sphi 0, %s101
      %s105 = sphi 0, %s104
      %s121 = sphi 0, %s105
      %s127 = sphi 0, %s129
      %s130 = sphi 0, %s127
      %s131 = sphi 0, %s130
      %s147 = sphi 0, %s131
      %s153 = sphi 0, %s155
      %s156 = sphi 0, %s153
      %s157 = sphi 0, %s156
      %s173 = sphi 0, %s157
      %s177 = sphi 0, %s177
      %s179 = sphi 0, %s177
      %s180 = sphi 0, %s179
      %s194 = sphi 0, %s180
    $region4: #{tpu_custom_call.1} parent=1 // loop_header_branch
      %16 = sbr.rel (%p14) target = $region8
    $region5: #{tpu_custom_call.1} parent=1 // loop_body
      %s18 = ssub.s32 %s13, 1
      %s19 = ssub.s32 %s13, 2
      %s20 = sadd.s32 %s13, 1
      %s21 = ssub.s32 %s13, %s20
      %p22 = scmp.eq.s32.totalorder %s21, 0
      %s24 = sadd.s32 %s23, 1
      %s25 = scalar_select %p22, %s23, %s24
      %p28 = pneg %p22
      %p29 = scmp.eq.s32.totalorder %s13, 2
      %p30 = por %p28, %p29
      %p31 = scmp.ne.s32.totalorder %s23, %s26
      %p32 = scmp.eq.s32.totalorder %s13, 0
      %p33 = por %p31, %p32
      %p34 = scmp.ne.s32.totalorder %s23, %s26
      %p35 = scmp.eq.s32.totalorder %s18, 2
      %p36 = por %p34, %p35
      %p37 = scmp.ne.s32.totalorder %s26, %s27
      %p38 = scmp.eq.s32.totalorder %s18, 0
      %p39 = por %p37, %p38
      %p40 = scmp.ne.s32.totalorder %s26, %s27
      %p41 = scmp.eq.s32.totalorder %s19, 2
      %p42 = por %p40, %p41
      %p44 = scmp.ne.s32.totalorder %s27, %s43
      %p45 = scmp.eq.s32.totalorder %s19, 0
      %p46 = por %p44, %p45
      %s47 = ssub.s32 %s13, %s20
      %p48 = scmp.eq.s32.totalorder %s47, 0
      %s50 = sadd.s32 %s49, 1
      %s51 = scalar_select %p48, %s49, %s50
      %p54 = pneg %p48
      %p55 = scmp.eq.s32.totalorder %s13, 2
      %p56 = por %p54, %p55
      %p57 = scmp.ne.s32.totalorder %s49, %s52
      %p58 = scmp.eq.s32.totalorder %s13, 0
      %p59 = por %p57, %p58
      %p60 = scmp.ne.s32.totalorder %s49, %s52
      %p61 = scmp.eq.s32.totalorder %s18, 2
      %p62 = por %p60, %p61
      %p63 = scmp.ne.s32.totalorder %s52, %s53
      %p64 = scmp.eq.s32.totalorder %s18, 0
      %p65 = por %p63, %p64
      %p66 = scmp.ne.s32.totalorder %s52, %s53
      %p67 = scmp.eq.s32.totalorder %s19, 2
      %p68 = por %p66, %p67
      %p70 = scmp.ne.s32.totalorder %s53, %s69
      %p71 = scmp.eq.s32.totalorder %s19, 0
      %p72 = por %p70, %p71
      %s73 = ssub.s32 %s13, %s20
      %p74 = scmp.eq.s32.totalorder %s73, 0
      %s76 = sadd.s32 %s75, 1
      %s77 = scalar_select %p74, %s75, %s76
      %p80 = pneg %p74
      %p81 = scmp.eq.s32.totalorder %s13, 2
      %p82 = por %p80, %p81
      %p83 = scmp.ne.s32.totalorder %s75, %s78
      %p84 = scmp.eq.s32.totalorder %s13, 0
      %p85 = por %p83, %p84
      %p86 = scmp.ne.s32.totalorder %s75, %s78
      %p87 = scmp.eq.s32.totalorder %s18, 2
      %p88 = por %p86, %p87
      %p89 = scmp.ne.s32.totalorder %s78, %s79
      %p90 = scmp.eq.s32.totalorder %s18, 0
      %p91 = por %p89, %p90
      %p92 = scmp.ne.s32.totalorder %s78, %s79
      %p93 = scmp.eq.s32.totalorder %s19, 2
      %p94 = por %p92, %p93
      %p96 = scmp.ne.s32.totalorder %s79, %s95
      %p97 = scmp.eq.s32.totalorder %s19, 0
      %p98 = por %p96, %p97
      %s99 = ssub.s32 %s13, %s20
      %p100 = scmp.eq.s32.totalorder %s99, 0
      %s102 = sadd.s32 %s101, 1
      %s103 = scalar_select %p100, %s101, %s102
      %p106 = pneg %p100
      %p107 = scmp.eq.s32.totalorder %s13, 2
      %p108 = por %p106, %p107
      %p109 = scmp.ne.s32.totalorder %s101, %s104
      %p110 = scmp.eq.s32.totalorder %s13, 0
      %p111 = por %p109, %p110
      %p112 = scmp.ne.s32.totalorder %s101, %s104
      %p113 = scmp.eq.s32.totalorder %s18, 2
      %p114 = por %p112, %p113
      %p115 = scmp.ne.s32.totalorder %s104, %s105
      %p116 = scmp.eq.s32.totalorder %s18, 0
      %p117 = por %p115, %p116
      %p118 = scmp.ne.s32.totalorder %s104, %s105
      %p119 = scmp.eq.s32.totalorder %s19, 2
      %p120 = por %p118, %p119
      %p122 = scmp.ne.s32.totalorder %s105, %s121
      %p123 = scmp.eq.s32.totalorder %s19, 0
      %p124 = por %p122, %p123
      %s125 = ssub.s32 %s13, %s20
      %p126 = scmp.eq.s32.totalorder %s125, 0
      %s128 = sadd.s32 %s127, 1
      %s129 = scalar_select %p126, %s127, %s128
      %p132 = pneg %p126
      %p133 = scmp.eq.s32.totalorder %s13, 2
      %p134 = por %p132, %p133
      %p135 = scmp.ne.s32.totalorder %s127, %s130
      %p136 = scmp.eq.s32.totalorder %s13, 0
      %p137 = por %p135, %p136
      %p138 = scmp.ne.s32.totalorder %s127, %s130
      %p139 = scmp.eq.s32.totalorder %s18, 2
      %p140 = por %p138, %p139
      %p141 = scmp.ne.s32.totalorder %s130, %s131
      %p142 = scmp.eq.s32.totalorder %s18, 0
      %p143 = por %p141, %p142
      %p144 = scmp.ne.s32.totalorder %s130, %s131
      %p145 = scmp.eq.s32.totalorder %s19, 2
      %p146 = por %p144, %p145
      %p148 = scmp.ne.s32.totalorder %s131, %s147
      %p149 = scmp.eq.s32.totalorder %s19, 0
      %p150 = por %p148, %p149
      %s151 = ssub.s32 %s13, %s20
      %p152 = scmp.eq.s32.totalorder %s151, 0
      %s154 = sadd.s32 %s153, 1
      %s155 = scalar_select %p152, %s153, %s154
      %p158 = pneg %p152
      %p159 = scmp.eq.s32.totalorder %s13, 2
      %p160 = por %p158, %p159
      %p161 = scmp.ne.s32.totalorder %s153, %s156
      %p162 = scmp.eq.s32.totalorder %s13, 0
      %p163 = por %p161, %p162
      %p164 = scmp.ne.s32.totalorder %s153, %s156
      %p165 = scmp.eq.s32.totalorder %s18, 2
      %p166 = por %p164, %p165
      %p167 = scmp.ne.s32.totalorder %s156, %s157
      %p168 = scmp.eq.s32.totalorder %s18, 0
      %p169 = por %p167, %p168
      %p170 = scmp.ne.s32.totalorder %s156, %s157
      %p171 = scmp.eq.s32.totalorder %s19, 2
      %p172 = por %p170, %p171
      %p174 = scmp.ne.s32.totalorder %s157, %s173
      %p175 = scmp.eq.s32.totalorder %s19, 0
      %p176 = por %p174, %p175
      %s178 = sadd.s32 %s177, 1
      %p181 = scmp.eq.s32.totalorder %s13, 2
      %p182 = scmp.ne.s32.totalorder %s177, %s179
      %p183 = scmp.eq.s32.totalorder %s13, 0
      %p184 = por %p182, %p183
      %p185 = scmp.ne.s32.totalorder %s177, %s179
      %p186 = scmp.eq.s32.totalorder %s18, 2
      %p187 = por %p185, %p186
      %p188 = scmp.ne.s32.totalorder %s179, %s180
      %p189 = scmp.eq.s32.totalorder %s18, 0
      %p190 = por %p188, %p189
      %p191 = scmp.ne.s32.totalorder %s179, %s180
      %p192 = scmp.eq.s32.totalorder %s19, 2
      %p193 = por %p191, %p192
      %p195 = scmp.ne.s32.totalorder %s180, %s194
      %p196 = scmp.eq.s32.totalorder %s19, 0
      %p197 = por %p195, %p196
      %p198 = scmp.le.s32.totalorder 1, %s13
      %p199 = scmp.lt.s32.totalorder %s13, 4
      %p200 = pnand %p198, %p199
      %p201 = pneg %p200
      // Predicated region
      $region9: #{tpu_custom_call.1} parent=5 // pred_check
        _
      $region10: #{tpu_custom_call.1} parent=5 // pred_check_branch
        %203 = sbr.rel (%p200) target = $region12
      $region11: #{tpu_custom_call.1} parent=5 // pred_region
        %s204 = ssub.s32 %s13, 1
      $region12: #{tpu_custom_call.1} parent=5 // pred_fallthru
        _
      %p205 = scmp.lt.s32.totalorder %s13, 3
      // Predicated region
      $region13: #{tpu_custom_call.1} parent=5 // pred_check
        %p206 = pneg %p205
      $region14: #{tpu_custom_call.1} parent=5 // pred_check_branch
        %208 = sbr.rel (%p206) target = $region16
      $region15: #{tpu_custom_call.1} parent=5 // pred_region
        // Predicated region
        $region17: #{tpu_custom_call.1} parent=15 // pred_check
          %p209 = pneg %p33
        $region18: #{tpu_custom_call.1} parent=15 // pred_check_branch
          %211 = sbr.rel (%p209) target = $region20
        $region19: #{tpu_custom_call.1} parent=15 // pred_region
          %p212 = scmp.lt.s32.totalorder %s13, 2
          %s213 = scalar_select %p212, %s13, 2
          %s214 = smul.addr %s213, 8
          %s215 = scalar_lea.vmem %s0, %s214
        $region20: #{tpu_custom_call.1} parent=15 // pred_fallthru
          _
        // Predicated region
        $region21: #{tpu_custom_call.1} parent=15 // pred_check
          %p216 = pneg %p59
        $region22: #{tpu_custom_call.1} parent=15 // pred_check_branch
          %218 = sbr.rel (%p216) target = $region24
        $region23: #{tpu_custom_call.1} parent=15 // pred_region
          %p219 = scmp.lt.s32.totalorder %s13, 2
          %s220 = scalar_select %p219, %s13, 2
          %s221 = smul.addr %s220, 8
          %s222 = scalar_lea.vmem %s1, %s221
        $region24: #{tpu_custom_call.1} parent=15 // pred_fallthru
          _
        // Predicated region
        $region25: #{tpu_custom_call.1} parent=15 // pred_check
          %p223 = pneg %p85
        $region26: #{tpu_custom_call.1} parent=15 // pred_check_branch
          %225 = sbr.rel (%p223) target = $region28
        $region27: #{tpu_custom_call.1} parent=15 // pred_region
          %p226 = scmp.lt.s32.totalorder %s13, 2
          %s227 = scalar_select %p226, %s13, 2
          %s228 = smul.addr %s227, 8
          %s229 = scalar_lea.vmem %s2, %s228
        $region28: #{tpu_custom_call.1} parent=15 // pred_fallthru
          _
        // Predicated region
        $region29: #{tpu_custom_call.1} parent=15 // pred_check
          %p230 = pneg %p111
        $region30: #{tpu_custom_call.1} parent=15 // pred_check_branch
          %232 = sbr.rel (%p230) target = $region32
        $region31: #{tpu_custom_call.1} parent=15 // pred_region
          %p233 = scmp.lt.s32.totalorder %s13, 2
          %s234 = scalar_select %p233, %s13, 2
          %s235 = smul.addr %s234, 8
          %s236 = scalar_lea.vmem %s3, %s235
        $region32: #{tpu_custom_call.1} parent=15 // pred_fallthru
          _
        // Predicated region
        $region33: #{tpu_custom_call.1} parent=15 // pred_check
          %p237 = pneg %p137
        $region34: #{tpu_custom_call.1} parent=15 // pred_check_branch
          %239 = sbr.rel (%p237) target = $region36
        $region35: #{tpu_custom_call.1} parent=15 // pred_region
          %p240 = scmp.lt.s32.totalorder %s13, 2
          %s241 = scalar_select %p240, %s13, 2
          %s242 = smul.addr %s241, 8
          %s243 = scalar_lea.vmem %s4, %s242
        $region36: #{tpu_custom_call.1} parent=15 // pred_fallthru
          _
        // Predicated region
        $region37: #{tpu_custom_call.1} parent=15 // pred_check
          %p244 = pneg %p163
        $region38: #{tpu_custom_call.1} parent=15 // pred_check_branch
          %246 = sbr.rel (%p244) target = $region40
        $region39: #{tpu_custom_call.1} parent=15 // pred_region
          %p247 = scmp.lt.s32.totalorder %s13, 2
          %s248 = scalar_select %p247, %s13, 2
          %s249 = smul.addr %s248, 8
          %s250 = scalar_lea.vmem %s5, %s249
        $region40: #{tpu_custom_call.1} parent=15 // pred_fallthru
          _
      $region16: #{tpu_custom_call.1} parent=5 // pred_fallthru
        _
      %p251 = scmp.le.s32.totalorder 1, %s13
      %p252 = scmp.lt.s32.totalorder %s13, 4
      %p253 = pnand %p251, %p252
      %p254 = pneg %p253
      // Predicated region
      $region41: #{tpu_custom_call.1} parent=5 // pred_check
        _
      $region42: #{tpu_custom_call.1} parent=5 // pred_check_branch
        %256 = sbr.rel (%p253) target = $region44
      $region43: #{tpu_custom_call.1} parent=5 // pred_region
        %s257 = ssub.s32 %s13, 1
        %p258 = scmp.lt.s32.totalorder %s18, 2
        %s259 = scalar_select %p258, %s18, 2
        %s260 = smul.addr %s259, 8
        %s261 = scalar_lea.vmem %s0, %s260
        %p262 = pneg %p39
        %p263 = pneg %p36
        %p264 = scmp.lt.s32.totalorder %s18, 2
        %s265 = scalar_select %p264, %s18, 2
        %s266 = smul.addr %s265, 8
        %s267 = scalar_lea.vmem %s1, %s266
        %p268 = pneg %p65
        %p269 = pneg %p62
        %p270 = scmp.lt.s32.totalorder %s18, 2
        %s271 = scalar_select %p270, %s18, 2
        %s272 = smul.addr %s271, 8
        %s273 = scalar_lea.vmem %s2, %s272
        %p274 = pneg %p91
        %p275 = pneg %p88
        %p276 = scmp.lt.s32.totalorder %s18, 2
        %s277 = scalar_select %p276, %s18, 2
        %s278 = smul.addr %s277, 8
        %s279 = scalar_lea.vmem %s3, %s278
        %p280 = pneg %p117
        %p281 = pneg %p114
        %p282 = scmp.lt.s32.totalorder %s18, 2
        %s283 = scalar_select %p282, %s18, 2
        %s284 = smul.addr %s283, 8
        %s285 = scalar_lea.vmem %s4, %s284
        %p286 = pneg %p143
        %p287 = pneg %p140
        %p288 = scmp.lt.s32.totalorder %s18, 2
        %s289 = scalar_select %p288, %s18, 2
        %s290 = smul.addr %s289, 8
        %s291 = scalar_lea.vmem %s5, %s290
        %p292 = pneg %p169
        %p293 = pneg %p166
        %p294 = pneg %p190
        %p295 = pneg %p187
        %p296 = scmp.lt.s32.totalorder %s18, 2
        %s297 = scalar_select %p296, %s18, 2
        %s298 = smul.addr %s297, 8
        %s299 = scalar_lea.vmem %s0, %s298
        %p300 = scmp.lt.s32.totalorder %s18, 2
        %s301 = scalar_select %p300, %s18, 2
        %s302 = smul.addr %s301, 8
        %s303 = scalar_lea.vmem %s1, %s302
        %p304 = scmp.lt.s32.totalorder %s18, 2
        %s305 = scalar_select %p304, %s18, 2
        %s306 = smul.addr %s305, 8
        %s307 = scalar_lea.vmem %s2, %s306
        %p308 = scmp.lt.s32.totalorder %s18, 2
        %s309 = scalar_select %p308, %s18, 2
        %s310 = smul.addr %s309, 8
        %s311 = scalar_lea.vmem %s3, %s310
        %p312 = scmp.lt.s32.totalorder %s18, 2
        %s313 = scalar_select %p312, %s18, 2
        %s314 = smul.addr %s313, 8
        %s315 = scalar_lea.vmem %s4, %s314
        %p316 = scmp.lt.s32.totalorder %s18, 2
        %s317 = scalar_select %p316, %s18, 2
        %s318 = smul.addr %s317, 8
        %s319 = scalar_lea.vmem %s5, %s318
        %p320 = scmp.eq.s32.totalorder %s18, 0
        // Predicated region
        $region45: #{tpu_custom_call.1} parent=43 // pred_check
          %p321 = pneg %p320
        $region46: #{tpu_custom_call.1} parent=43 // pred_check_branch
          %323 = sbr.rel (%p321) target = $region48
        $region47: #{tpu_custom_call.1} parent=43 // pred_region
          %324 = vst [vmem:[#allocation2] sm:$0x1] 0.0
        $region48: #{tpu_custom_call.1} parent=43 // pred_fallthru
          _
        %v325 = vld [vmem:[%s299] sm:$0xff]
        %v326 = vld [vmem:[%s303] sm:$0xff]
        %v327 = vld [vmem:[%s307] sm:$0xff]
        %v328 = vld [vmem:[%s311] sm:$0xff]
        %v329 = vld [vmem:[%s315] sm:$0xff]
        %v330 = vld [vmem:[%s319] sm:$0xff]
        %v331 = vlaneseq
        %v332 = vshrl.u32 %v331, 7
        %s333 = smul.u32 %s18, 8
        %v334 = vstv %s333
        %v335 = vadd.s32 %v332, %v334
        %vm336 = vcmp.lt.s32.totalorder %v335, 20
        %vm337 = vcmask 39936
        %v338 = vsel %vm337, %v325, -inf
        %339 = vmax.xlane.f32.xlu0 %v338
        %v340 = vpop.xlane.xlu0 %339
        %v341 = vsub.f32 %v325, %v340
        %v342 = vmul.f32 %v341, 1.442695
        %v343 = vpow.pop %v342
        %v344 = vsel %vm337, %v343, 0.0
        %345 = vadd.xlane.f32.xlu0 %v344
        %v346 = vpop.xlane.xlu0 %345
        %v347 = vlog2.pop %v346
        %v348 = vmul.f32 %v347, 0.6931472
        %v349 = vsub.f32 %v341, %v348
        %v350 = vlaneseq
        %v351 = vand.u32 %v350, 127
        %352 = vset.pattern.permute.xlu0 0
        %353 = vperm.xlu0 %352, %v328
        %v354 = vpop.permute.xlu0 %353
        %vm355 = vcmp.eq.s32.totalorder %v351, %v354
        %v356 = vsel %vm355, 1, 0
        %v357 = vcvt.s32.f32 %v356
        %v358 = vmul.f32 %v349, %v357
        %v359 = vsel %vm337, %v358, 0.0
        %360 = vadd.xlane.f32.xlu0 %v359
        %v361 = vpop.xlane.xlu0 %360
        %vm362 = vcmp.eq.s32.totalorder %v328, 4
        %v363 = vsel %vm362, 0.1, 1.0
        %v364 = vsub.f32 0.0, %v361
        %v365 = vmul.f32 %v364, %v363
        %v366 = vsel %vm336, %v365, 0.0
        %vm367 = vcmask 7168
        %v368 = vsel %vm367, %v366, 0.0
        %v369 = vrot.slane %v368, 4
        %v370 = vadd.f32 %v368, %v369
        %v371 = vrot.slane %v370, 2
        %v372 = vadd.f32 %v370, %v371
        %v373 = vrot.slane %v372, 1
        %v374 = vadd.f32 %v372, %v373
        %v375 = vsel %vm336, %v363, 0.0
        %v376 = vsel %vm367, %v375, 0.0
        %v377 = vrot.slane %v376, 4
        %v378 = vadd.f32 %v376, %v377
        %v379 = vrot.slane %v378, 2
        %v380 = vadd.f32 %v378, %v379
        %v381 = vrot.slane %v380, 1
        %v382 = vadd.f32 %v380, %v381
        %vm383 = vcmp.eq.f32.partialorder %v325, %v340
        %v384 = vsel %vm383, %v351, 5
        %v385 = vsel %vm337, %v384, 2147483647
        %v386 = vand.u32 %v385, 65535
        %v387 = vshra.s32 %v385, 16
        %v388 = vcvt.s32.f32 %v386
        %v389 = vcvt.s32.f32 %v387
        %390 = vmin.xlane.f32.xlu0 %v389
        %v391 = vpop.xlane.xlu0 %390
        %vm392 = vcmp.eq.f32.partialorder %v389, %v391
        %v393 = vsel %vm392, %v388, inf
        %394 = vmin.xlane.f32.xlu0 %v393
        %v395 = vpop.xlane.xlu0 %394
        %v396 = vcvt.f32.s32 %v395
        %v397 = vcvt.f32.s32 %v391
        %v398 = vshll.u32 %v397, 16
        %v399 = vadd.s32 %v398, %v396
        %vm400 = vcmp.eq.s32.totalorder %v399, %v328
        %v401 = vsel %vm400, 1, 0
        %v402 = vcvt.s32.f32 %v401
        %v403 = vsel %vm336, %v402, 0.0
        %v404 = vsel %vm367, %v403, 0.0
        %v405 = vrot.slane %v404, 4
        %v406 = vadd.f32 %v404, %v405
        %v407 = vrot.slane %v406, 2
        %v408 = vadd.f32 %v406, %v407
        %v409 = vrot.slane %v408, 1
        %v410 = vadd.f32 %v408, %v409
        %v411 = vsel %vm336, 1, 0
        %vm412 = vcmp.eq.s32.totalorder %v411, 1
        %v413 = vsel %vm412, %v326, 0.5
        %v414 = vlog2.pop %v413
        %v415 = vmul.f32 %v414, 0.6931472
        %v416 = vsub.f32 1.0, %v413
        %v417 = vlog2.pop %v416
        %v418 = vmul.f32 %v417, 0.6931472
        %vm419 = vcmask 130048
        %v420 = vsel %vm419, %v329, 0.0
        %421 = vadd.xlane.f32.xlu0 %v420
        %v422 = vpop.xlane.xlu0 %421
        %v423 = vadd.f32 %v422, 0.001
        %v424 = vsub.f32 1.0, %v329
        %v425 = vsel %vm419, %v424, 0.0
        %426 = vadd.xlane.f32.xlu0 %v425
        %v427 = vpop.xlane.xlu0 %426
        %v428 = vmul.f32 %v415, %v329
        %v429 = vsel %vm419, %v428, 0.0
        %430 = vadd.xlane.f32.xlu0 %v429
        %v431 = vpop.xlane.xlu0 %430
        %v432 = vrcp.pop %v423
        %v433 = vmul.f32 %v431, %v432
        %v434 = vmul.f32 %v418, %v424
        %v435 = vsel %vm419, %v434, 0.0
        %436 = vadd.xlane.f32.xlu0 %v435
        %v437 = vpop.xlane.xlu0 %436
        %v438 = vrcp.pop %v427
        %v439 = vmul.f32 %v437, %v438
        %v440 = vadd.f32 %v433, %v439
        %v441 = vsel %vm336, %v440, 0.0
        %v442 = vrot.slane %v441, 4
        %v443 = vadd.f32 %v441, %v442
        %v444 = vrot.slane %v443, 2
        %v445 = vadd.f32 %v443, %v444
        %v446 = vrot.slane %v445, 1
        %v447 = vadd.f32 %v445, %v446
        %v448 = vsel %vm419, %v415, 0.0
        %449 = vadd.xlane.f32.xlu0 %v448
        %v450 = vpop.xlane.xlu0 %449
        %v451 = vsel %vm336, %v450, 0.0
        %v452 = vrot.slane %v451, 4
        %v453 = vadd.f32 %v451, %v452
        %v454 = vrot.slane %v453, 2
        %v455 = vadd.f32 %v453, %v454
        %v456 = vrot.slane %v455, 1
        %v457 = vadd.f32 %v455, %v456
        %v458 = vsub.f32 %v327, %v330
        %v459 = vand.u32 2147483647, %v458
        %vm460 = vcmask 31744
        %v461 = vsel %vm460, %v459, 0.0
        %462 = vadd.xlane.f32.xlu0 %v461
        %v463 = vpop.xlane.xlu0 %462
        %v464 = vsel %vm336, %v463, 0.0
        %v465 = vrot.slane %v464, 4
        %v466 = vadd.f32 %v464, %v465
        %v467 = vrot.slane %v466, 2
        %v468 = vadd.f32 %v466, %v467
        %v469 = vrot.slane %v468, 1
        %v470 = vadd.f32 %v468, %v469
        %v471 = vmul.f32 %v327, 0.5
        %473 = vrot.lane.b32.xlu0 %v471, 126
        %v474 = vpop.permute.xlu0 %473
        %v476 = vsub.f32 %v327, %v474
        %v477 = vadd.f32 %v327, %v474
        %v478 = vmul.f32 %v330, 0.5
        %480 = vrot.lane.b32.xlu0 %v478, 126
        %v481 = vpop.permute.xlu0 %480
        %v483 = vsub.f32 %v330, %v481
        %v484 = vadd.f32 %v330, %v481
        %v485 = vsub.f32 %v477, %v476
        %487 = vrot.lane.b32.xlu0 %v485, 127
        %v488 = vpop.permute.xlu0 %487
        %v490 = vmul.f32 %v485, %v488
        %v491 = vsub.f32 %v484, %v483
        %493 = vrot.lane.b32.xlu0 %v491, 127
        %v494 = vpop.permute.xlu0 %493
        %v496 = vmul.f32 %v491, %v494
        %v497 = vmin.f32 %v477, %v484
        %v498 = vmax.f32 %v476, %v483
        %v499 = vsub.f32 %v497, %v498
        %v500 = vmax.f32 %v499, 0.0
        %502 = vrot.lane.b32.xlu0 %v500, 127
        %v503 = vpop.permute.xlu0 %502
        %v505 = vmul.f32 %v500, %v503
        %v506 = vadd.f32 %v490, %v496
        %v507 = vsub.f32 %v506, %v505
        %v508 = vrcp.pop %v507
        %v509 = vmul.f32 %v505, %v508
        %v510 = vmax.f32 %v477, %v484
        %v511 = vmin.f32 %v476, %v483
        %v512 = vsub.f32 %v510, %v511
        %v513 = vmax.f32 %v512, 0.0
        %515 = vrot.lane.b32.xlu0 %v513, 127
        %v516 = vpop.permute.xlu0 %515
        %v518 = vmul.f32 %v513, %v516
        %v519 = vsub.f32 %v518, %v507
        %v520 = vrcp.pop %v518
        %v521 = vmul.f32 %v519, %v520
        %v522 = vsub.f32 %v509, %v521
        %v523 = vsub.f32 1.0, %v522
        %v524 = vsel %vm336, %v523, 0.0
        %v525 = vsel %vm367, %v524, 0.0
        %v526 = vrot.slane %v525, 4
        %v527 = vadd.f32 %v525, %v526
        %v528 = vrot.slane %v527, 2
        %v529 = vadd.f32 %v527, %v528
        %v530 = vrot.slane %v529, 1
        %v531 = vadd.f32 %v529, %v530
        %v532 = vld [vmem:[#allocation2] sm:$0x1]
        %vm533 = vcmp.eq.s32.totalorder %v351, 0
        %535 = vset.pattern.permute.xlu0 0
        %536 = vperm.xlu0 %535, %v374
        %v537 = vpop.permute.xlu0 %536
        %v539 = vsel %vm533, %v537, 0.0
        %vm540 = vcmp.eq.s32.totalorder %v351, 1
        %542 = vset.pattern.permute.xlu0 0
        %543 = vperm.xlu0 %542, %v382
        %v544 = vpop.permute.xlu0 %543
        %v546 = vsel %vm540, %v544, 0.0
        %v547 = vadd.f32 %v539, %v546
        %vm548 = vcmp.eq.s32.totalorder %v351, 2
        %550 = vset.pattern.permute.xlu0 0
        %551 = vperm.xlu0 %550, %v410
        %v552 = vpop.permute.xlu0 %551
        %v554 = vsel %vm548, %v552, 0.0
        %v555 = vadd.f32 %v547, %v554
        %vm556 = vcmp.eq.s32.totalorder %v351, 3
        %v557 = vsel %vm556, %v447, 0.0
        %v558 = vadd.f32 %v555, %v557
        %vm559 = vcmp.eq.s32.totalorder %v351, 4
        %v560 = vsel %vm559, %v457, 0.0
        %v561 = vadd.f32 %v558, %v560
        %vm562 = vcmp.eq.s32.totalorder %v351, 5
        %v563 = vsel %vm562, %v470, 0.0
        %v564 = vadd.f32 %v561, %v563
        %vm565 = vcmp.eq.s32.totalorder %v351, 6
        %567 = vset.pattern.permute.xlu0 0
        %568 = vperm.xlu0 %567, %v531
        %v569 = vpop.permute.xlu0 %568
        %v571 = vsel %vm565, %v569, 0.0
        %v572 = vadd.f32 %v564, %v571
        %v573 = vadd.f32 %v532, %v572
        %574 = vst [vmem:[#allocation2] sm:$0x1] %v573
        %p575 = scmp.eq.s32.totalorder %s18, 2
        // Predicated region
        $region49: #{tpu_custom_call.1} parent=43 // pred_check
          %p576 = pneg %p575
        $region50: #{tpu_custom_call.1} parent=43 // pred_check_branch
          %578 = sbr.rel (%p576) target = $region52
        $region51: #{tpu_custom_call.1} parent=43 // pred_region
          %v579 = vld [vmem:[#allocation2] sm:$0x1]
          %581 = vrot.lane.b32.xlu0 %v579, 127
          %v582 = vpop.permute.xlu0 %581
          %v584 = vrcp.pop %v582
          %v585 = vmul.f32 %v579, %v584
          %v586 = vmul.f32 %v579, 5.0
          %v587 = vsub.f32 100.0, %v586
          %v588 = vmul.f32 %v579, 0.05
          %v589 = vsub.f32 0.0, %v588
          %vm590 = vcmp.ne.f32.partialorder %v589, %v589
          %v591 = vand.u32 2147483647, %v589
          %vm592 = vcmp.eq.f32.partialorder %v591, inf
          %vm593 = vmor %vm590, %vm592
          %v594 = vmul.f32 %v579, 0.0
          %596 = vrot.lane.b32.xlu0 %v594, 127
          %v597 = vpop.permute.xlu0 %596
          %v599 = vsel %vm593, %v597, %v589
          %601 = vset.pattern.permute.xlu0 0
          %602 = vperm.xlu0 %601, %v585
          %v603 = vpop.permute.xlu0 %602
          %v605 = vlaneseq
          %v606 = vshrl.u32 %v605, 7
          %v607 = vsub.s32 0, %v606
          %v608 = vrot.slane %v603, %v607
          %v609 = vsel %vm533, %v608, 0.0
          %611 = vset.pattern.permute.xlu0 2
          %612 = vperm.xlu0 %611, %v587
          %v613 = vpop.permute.xlu0 %612
          %v615 = vlaneseq
          %v616 = vshrl.u32 %v615, 7
          %v617 = vsub.s32 0, %v616
          %v618 = vrot.slane %v613, %v617
          %v619 = vsel %vm540, %v618, 0.0
          %v620 = vadd.f32 %v609, %v619
          %622 = vset.pattern.permute.xlu0 3
          %623 = vperm.xlu0 %622, %v599
          %v624 = vpop.permute.xlu0 %623
          %v626 = vlaneseq
          %v627 = vshrl.u32 %v626, 7
          %v628 = vsub.s32 0, %v627
          %v629 = vrot.slane %v624, %v628
          %v630 = vsel %vm548, %v629, 0.0
          %v631 = vadd.f32 %v620, %v630
          %632 = vset.pattern.permute.xlu0 5
          %633 = vperm.xlu0 %632, %v579
          %v634 = vpop.permute.xlu0 %633
          %v636 = vlaneseq
          %v637 = vshrl.u32 %v636, 7
          %v638 = vsub.s32 0, %v637
          %v639 = vrot.slane %v634, %v638
          %v640 = vsel %vm556, %v639, 0.0
          %v641 = vadd.f32 %v631, %v640
          %642 = vset.pattern.permute.xlu0 6
          %643 = vperm.xlu0 %642, %v579
          %v644 = vpop.permute.xlu0 %643
          %v646 = vlaneseq
          %v647 = vshrl.u32 %v646, 7
          %v648 = vsub.s32 0, %v647
          %v649 = vrot.slane %v644, %v648
          %v650 = vsel %vm559, %v649, 0.0
          %v651 = vadd.f32 %v641, %v650
          %652 = vst [vmem:[#allocation3] sm:$0x1] %v651
        $region52: #{tpu_custom_call.1} parent=43 // pred_fallthru
          _
        // Predicated region
        $region53: #{tpu_custom_call.1} parent=43 // pred_check
          %p653 = pneg %p187
        $region54: #{tpu_custom_call.1} parent=43 // pred_check_branch
          %655 = sbr.rel (%p653) target = $region56
        $region55: #{tpu_custom_call.1} parent=43 // pred_region
          %s657 = ssub.s32 16, 16
          %658 = vsyncadd [#allocation4], %s657
          %s660 = sshll.u32 [#allocation3], 4
          %s661 = int_to_ptr.vmem [resolvable:$true] %s660
          %663 = dma.vmem_to_hbm [thread:$0]  %s661, 16, %s6, [#allocation4]
        $region56: #{tpu_custom_call.1} parent=43 // pred_fallthru
          _
        // Predicated region
        $region57: #{tpu_custom_call.1} parent=43 // pred_check
          %p664 = pneg %p187
        $region58: #{tpu_custom_call.1} parent=43 // pred_check_branch
          %666 = sbr.rel (%p664) target = $region60
        $region59: #{tpu_custom_call.1} parent=43 // pred_region
          %667 = dma.done [#allocation4], 16
        $region60: #{tpu_custom_call.1} parent=43 // pred_fallthru
          _
      $region44: #{tpu_custom_call.1} parent=5 // pred_fallthru
        _
      %p668 = scmp.le.s32.totalorder 2, %s13
      // Predicated region
      $region61: #{tpu_custom_call.1} parent=5 // pred_check
        %p669 = pneg %p668
      $region62: #{tpu_custom_call.1} parent=5 // pred_check_branch
        %671 = sbr.rel (%p669) target = $region64
      $region63: #{tpu_custom_call.1} parent=5 // pred_region
        %s672 = ssub.s32 %s13, 2
      $region64: #{tpu_custom_call.1} parent=5 // pred_fallthru
        _
    $region6: #{tpu_custom_call.1} parent=1 // loop_footer
      %s17 = sadd.s32 1, %s13
    $region7: #{tpu_custom_call.1} parent=1 // loop_footer_branch
      %12 = sbr.rel target = $region3
    $region8: #{tpu_custom_call.1} parent=1 // loop_exit
      _
    %673 = vsyncpa [#allocation4], 1
    %s674 = scalar_lea.sflag [#allocation4], 1
    %675 = vsyncpa %s674, 1

</llo_original>
